<compile_context>
chip_gen: v7x
topology: tpu7x:2x2x1
jax: 0.10.0
libtpu: 0.0.40
codegen_flags: <defaults>
</compile_context>

<pallas_src>
import numpy as np
import jax
import jax.numpy as jnp
from jax.experimental import pallas as pl
from jax.experimental.pallas import tpu as pltpu


def _round_up(x, m):
    return ((x + m - 1) // m) * m


# ----------------------------------------------------------------------------
# Kernel: fused Linear -> ReLU -> Linear   (Dropout(p=0.0) == identity)
# ----------------------------------------------------------------------------
def _text_hidden_fcs_kernel(x_ref, w1_ref, b1_ref, w2_ref, b2_ref, o_ref):
    x = x_ref[...]                                                    # (tm, in_dim)
    h = jnp.dot(x, w1_ref[...],
                preferred_element_type=jnp.float32) + b1_ref[...]     # (tm, in_dim) f32
    h = jnp.maximum(h, 0.0)                                           # ReLU(inplace=True)
    # Keep h in f32 for the second matmul (MXU has huge slack here; the f32
    # multi-pass path is fully hidden under the HBM-bound DMA).
    y = jnp.dot(h, w2_ref[...].astype(jnp.float32),
                preferred_element_type=jnp.float32) + b2_ref[...]     # (tm, out_dim) f32
    # Dropout(p=0.0) == identity
    o_ref[...] = y.astype(o_ref.dtype)


# ----------------------------------------------------------------------------
# Wrapper
# ----------------------------------------------------------------------------
_SMALL_N_THRESHOLD = 4096        # below this, fused XLA beats pallas_call fixed cost
_MIN_GRID_STEPS = 8              # depth for 2-TC (v7x) sharding + pipeline overlap
_ROW_TILE_CAP = 4096             # rows per grid step (raised from 2048)
_VMEM_LIMIT_CAP = 48 * 1024 * 1024   # < v7x 64 MiB physical


def _vmem_plan(N, in_dim, out_dim, x_dtype, out_dtype, w_dtype, b_dtype,
               budget_bytes, tm):
    """Pick the row tile and a vmem_limit from the REAL per-step footprint."""
    lane_in = _round_up(in_dim, 128)     # lane padding of the narrow feature dim
    lane_out = _round_up(out_dim, 128)
    xb = np.dtype(x_dtype).itemsize
    ob = np.dtype(out_dtype).itemsize
    wb = np.dtype(w_dtype).itemsize
    bb = np.dtype(b_dtype).itemsize

    # per-row bytes: double-buffered x + out tiles, plus f32 intermediates h, y
    per_row = (2 * lane_in * xb + 2 * lane_out * ob
               + lane_in * 4 + lane_out * 4)
    # resident (double-buffered) weight / bias blocks
    fixed = (2 * _round_up(in_dim, 8) * (lane_in + lane_out) * wb
             + 2 * 8 * (lane_in + lane_out) * bb)

    if tm is None:
        tm = (budget_bytes - fixed) // per_row
        tm = max(8, min(_ROW_TILE_CAP, (tm // 8) * 8))
        # keep the grid >= _MIN_GRID_STEPS deep so both v7x TCs get work and the
        # double-buffer pipeline has >= 3 steps of prefetch overlap per core
        tm = min(tm, max(8, _round_up(pl.cdiv(N, _MIN_GRID_STEPS), 8)))
    else:
        tm = max(8, (int(tm) // 8) * 8)
    tm = min(tm, _round_up(N, 8))

    footprint = per_row * tm + fixed
    vmem_limit = int(min(max(footprint + (4 << 20), 16 << 20), _VMEM_LIMIT_CAP))
    return tm, vmem_limit


def text_hidden_fcs(x, w1, b1, w2, b2, *, tm=None, out_dtype=None,
                    force_kernel=False,
                    row_tile_budget_bytes=24 * 1024 * 1024):
    """Apply the GemmaLISA text_hidden_fcs MLP with a Pallas TPU kernel.

    x : (N, in_dim) hidden states (N = batch*seq), bf16 preferred (mem-bound op;
        an f32 output roughly doubles the dominant HBM write on v5e)
    w1: (in_dim, in_dim), b1: (1, in_dim)
    w2: (in_dim, out_dim), b2: (1, out_dim)
    returns (N, out_dim) in `out_dtype` (defaults to x.dtype)
    """
    N, in_dim = x.shape
    assert w1.shape == (in_dim, in_dim) and w2.shape[0] == in_dim
    out_dim = w2.shape[1]
    out_dtype = x.dtype if out_dtype is None else out_dtype

    # --- small-N fast path: pallas_call fixed cost dominates at module-realistic
    #     call sites; plain fused XLA is faster there --------------------------
    if N < _SMALL_N_THRESHOLD and not force_kernel:
        h = jnp.maximum(
            jnp.dot(x, w1, preferred_element_type=jnp.float32) + b1, 0.0)
        y = jnp.dot(h, w2.astype(jnp.float32),
                    preferred_element_type=jnp.float32) + b2
        return y.astype(out_dtype)

    tm, vmem_limit = _vmem_plan(N, in_dim, out_dim, x.dtype, out_dtype,
                                w1.dtype, b1.dtype, row_tile_budget_bytes, tm)

    grid = (pl.cdiv(N, tm),)   # ragged last block is masked by Pallas; no pad/slice

    x_bytes = np.dtype(x.dtype).itemsize
    o_bytes = np.dtype(out_dtype).itemsize
    w_bytes = np.dtype(w1.dtype).itemsize
    b_bytes = np.dtype(b1.dtype).itemsize
    cost = pl.CostEstimate(
        flops=2 * N * in_dim * (in_dim + out_dim),
        transcendentals=0,
        bytes_accessed=(N * in_dim * x_bytes
                        + N * out_dim * o_bytes
                        + (in_dim * in_dim + in_dim * out_dim) * w_bytes
                        + (in_dim + out_dim) * b_bytes),
    )

    return pl.pallas_call(
        _text_hidden_fcs_kernel,
        out_shape=jax.ShapeDtypeStruct((N, out_dim), out_dtype),
        grid_spec=pl.GridSpec(
            grid=grid,
            in_specs=[
                pl.BlockSpec((tm, in_dim), lambda i: (i, 0)),       # x row tile (streamed)
                pl.BlockSpec((in_dim, in_dim), lambda i: (0, 0)),   # W1 (resident)
                pl.BlockSpec((1, in_dim), lambda i: (0, 0)),        # b1 (resident)
                pl.BlockSpec((in_dim, out_dim), lambda i: (0, 0)),  # W2 (resident)
                pl.BlockSpec((1, out_dim), lambda i: (0, 0)),       # b2 (resident)
            ],
            out_specs=pl.BlockSpec((tm, out_dim), lambda i: (i, 0)),
        ),
        compiler_params=pltpu.CompilerParams(
            dimension_semantics=("parallel",),   # shards the row loop over v7x's 2 TCs
            vmem_limit_bytes=vmem_limit,         # derived from real footprint + margin
        ),
        cost_estimate=cost,
    )(x, w1, b1, w2, b2)


if __name__ == "__main__":
    # Small shapes consistent with the module's text_hidden_fcs:
    #   config.hidden_size (in_dim) = 32, config.out_dim = 256, batch = 2, seq = 8
    batch, seq, in_dim, out_dim = 2, 8, 32, 256

    key = jax.random.PRNGKey(0)
    k_x, k_w1, k_b1, k_w2, k_b2 = jax.random.split(key, 5)
    bound = 1.0 / (in_dim ** 0.5)   # torch.nn.Linear default uniform(+/- 1/sqrt(fan_in))

    # Hidden states from the LM, flattened token-major; bf16 storage (mem-bound op).
    x = jax.random.normal(k_x, (batch * seq, in_dim), jnp.float32).astype(jnp.bfloat16)
    w1 = jax.random.uniform(k_w1, (in_dim, in_dim), jnp.float32, -bound, bound).astype(jnp.bfloat16)
    b1 = jax.random.uniform(k_b1, (1, in_dim), jnp.float32, -bound, bound)
    w2 = jax.random.uniform(k_w2, (in_dim, out_dim), jnp.float32, -bound, bound).astype(jnp.bfloat16)
    b2 = jax.random.uniform(k_b2, (1, out_dim), jnp.float32, -bound, bound)

    # TODO(synk): SAM ViT-H (`build_sam_vit_h`) and the Gemma3 LM are pretrained
    # sub-models the module delegates to; they are not re-implemented here.

    def ref_fn(xr):
        xf = xr.astype(jnp.float32)
        h = jnp.maximum(xf @ w1.astype(jnp.float32) + b1, 0.0)
        return h @ w2.astype(jnp.float32) + b2

    # 1) Module-realistic small shape: takes the fused-XLA fast path.
    out_small = jax.block_until_ready(text_hidden_fcs(x, w1, b1, w2, b2))
    assert out_small.shape == (batch * seq, out_dim)
    assert jnp.allclose(out_small.astype(jnp.float32), ref_fn(x),
                        atol=2e-2, rtol=2e-2), \
        float(jnp.max(jnp.abs(out_small.astype(jnp.float32) - ref_fn(x))))

    # 2) Forced Pallas kernel on the same small input (multi-step grid, exact tiles).
    out_k = jax.block_until_ready(
        text_hidden_fcs(x, w1, b1, w2, b2, force_kernel=True))
    assert out_k.shape == (batch * seq, out_dim)
    assert jnp.allclose(out_k.astype(jnp.float32), ref_fn(x),
                        atol=2e-2, rtol=2e-2), \
        float(jnp.max(jnp.abs(out_k.astype(jnp.float32) - ref_fn(x))))

    # 3) Forced Pallas kernel on a ragged, multi-tile row count
    #    (exercises the cdiv grid + masked partial last block).
    N_big = 1000
    x_big = jax.random.normal(jax.random.PRNGKey(1), (N_big, in_dim),
                              jnp.float32).astype(jnp.bfloat16)
    out_big = jax.block_until_ready(
        text_hidden_fcs(x_big, w1, b1, w2, b2, force_kernel=True))
    assert out_big.shape == (N_big, out_dim)
    assert jnp.allclose(out_big.astype(jnp.float32), ref_fn(x_big),
                        atol=2e-2, rtol=2e-2), \
        float(jnp.max(jnp.abs(out_big.astype(jnp.float32) - ref_fn(x_big))))

    print("KERNEL_OK")
</pallas_src>

<mosaic_0001>
module attributes {stable_mosaic.version = 11 : i64} {
  func.func @_text_hidden_fcs_kernel(%arg0: i32, %arg1: memref<8x32xbf16, #tpu.memory_space<vmem>>, %arg2: memref<32x32xbf16, #tpu.memory_space<vmem>>, %arg3: memref<1x32xf32, #tpu.memory_space<vmem>>, %arg4: memref<32x256xbf16, #tpu.memory_space<vmem>>, %arg5: memref<1x256xf32, #tpu.memory_space<vmem>>, %arg6: memref<8x256xbf16, #tpu.memory_space<vmem>>) attributes {dimension_semantics = [#tpu.dimension_semantics<parallel>], iteration_bounds = array<i64: 2>, scalar_prefetch = 0 : i64, scratch_operands = 0 : i64, tpu.core_type = #tpu.core_type<tc>, window_params = [{transform_indices = @transform_0, window_bounds = array<i64: 8, 32>}, {pipeline_mode = #tpu.pipeline_mode<synchronous>, transform_indices = @transform_1, window_bounds = array<i64: 32, 32>}, {pipeline_mode = #tpu.pipeline_mode<synchronous>, transform_indices = @transform_2, window_bounds = array<i64: 1, 32>}, {pipeline_mode = #tpu.pipeline_mode<synchronous>, transform_indices = @transform_3, window_bounds = array<i64: 32, 256>}, {pipeline_mode = #tpu.pipeline_mode<synchronous>, transform_indices = @transform_4, window_bounds = array<i64: 1, 256>}, {transform_indices = @transform_5, window_bounds = array<i64: 8, 256>}]} {
    %c0 = arith.constant 0 : index
    %c0_0 = arith.constant 0 : index
    %0 = vector.load %arg1[%c0, %c0_0] : memref<8x32xbf16, #tpu.memory_space<vmem>>, vector<8x32xbf16>
    %c0_1 = arith.constant 0 : index
    %c0_2 = arith.constant 0 : index
    %1 = vector.load %arg2[%c0_1, %c0_2] : memref<32x32xbf16, #tpu.memory_space<vmem>>, vector<32x32xbf16>
    %cst = arith.constant dense<0.000000e+00> : vector<8x32xf32>
    %2 = tpu.matmul %0, %1, %cst {dimension_numbers = #tpu.dot_dimension_numbers<[1], [0], [0], [1], [0, 0, 1, 1], [], []>} : vector<8x32xbf16>, vector<32x32xbf16>, vector<8x32xf32> -> vector<8x32xf32>
    %c0_3 = arith.constant 0 : index
    %c0_4 = arith.constant 0 : index
    %3 = vector.load %arg3[%c0_3, %c0_4] : memref<1x32xf32, #tpu.memory_space<vmem>>, vector<1x32xf32>
    %4 = vector.broadcast %3 : vector<1x32xf32> to vector<8x32xf32>
    %5 = arith.addf %2, %4 : vector<8x32xf32>
    %cst_5 = arith.constant 0.000000e+00 : f32
    %6 = vector.broadcast %cst_5 : f32 to vector<8x32xf32>
    %7 = arith.maximumf %5, %6 : vector<8x32xf32>
    %c0_6 = arith.constant 0 : index
    %c0_7 = arith.constant 0 : index
    %8 = vector.load %arg4[%c0_6, %c0_7] : memref<32x256xbf16, #tpu.memory_space<vmem>>, vector<32x256xbf16>
    %9 = arith.extf %8 : vector<32x256xbf16> to vector<32x256xf32>
    %cst_8 = arith.constant dense<0.000000e+00> : vector<8x256xf32>
    %10 = tpu.matmul %7, %9, %cst_8 {dimension_numbers = #tpu.dot_dimension_numbers<[1], [0], [0], [1], [0, 0, 1, 1], [], []>} : vector<8x32xf32>, vector<32x256xf32>, vector<8x256xf32> -> vector<8x256xf32>
    %c0_9 = arith.constant 0 : index
    %c0_10 = arith.constant 0 : index
    %11 = vector.load %arg5[%c0_9, %c0_10] : memref<1x256xf32, #tpu.memory_space<vmem>>, vector<1x256xf32>
    %12 = vector.broadcast %11 : vector<1x256xf32> to vector<8x256xf32>
    %13 = arith.addf %10, %12 : vector<8x256xf32>
    %14 = arith.truncf %13 : vector<8x256xf32> to vector<8x256xbf16>
    %c0_11 = arith.constant 0 : index
    %c0_12 = arith.constant 0 : index
    %15 = vector.load %arg6[%c0_11, %c0_12] : memref<8x256xbf16, #tpu.memory_space<vmem>>, vector<8x256xbf16>
    tpu.vector_store %arg6[%c0_11, %c0_12], %14 {strides = array<i32>} : memref<8x256xbf16, #tpu.memory_space<vmem>>, vector<8x256xbf16>,
    return
  }
  func.func @transform_0(%arg0: i32) -> (i32, i32) {
    %c0_i32 = arith.constant 0 : i32
    %c0_i32_0 = arith.constant 0 : i32
    return %arg0, %c0_i32 : i32, i32
  }
  func.func @transform_1(%arg0: i32) -> (i32, i32) {
    %c0_i32 = arith.constant 0 : i32
    %c0_i32_0 = arith.constant 0 : i32
    %c0_i32_1 = arith.constant 0 : i32
    return %c0_i32, %c0_i32_0 : i32, i32
  }
  func.func @transform_2(%arg0: i32) -> (i32, i32) {
    %c0_i32 = arith.constant 0 : i32
    %c0_i32_0 = arith.constant 0 : i32
    %c0_i32_1 = arith.constant 0 : i32
    return %c0_i32, %c0_i32_0 : i32, i32
  }
  func.func @transform_3(%arg0: i32) -> (i32, i32) {
    %c0_i32 = arith.constant 0 : i32
    %c0_i32_0 = arith.constant 0 : i32
    %c0_i32_1 = arith.constant 0 : i32
    return %c0_i32, %c0_i32_0 : i32, i32
  }
  func.func @transform_4(%arg0: i32) -> (i32, i32) {
    %c0_i32 = arith.constant 0 : i32
    %c0_i32_0 = arith.constant 0 : i32
    %c0_i32_1 = arith.constant 0 : i32
    return %c0_i32, %c0_i32_0 : i32, i32
  }
  func.func @transform_5(%arg0: i32) -> (i32, i32) {
    %c0_i32 = arith.constant 0 : i32
    %c0_i32_0 = arith.constant 0 : i32
    return %arg0, %c0_i32 : i32, i32
  }
}

</mosaic_0001>

<llo_original>
// kernel: tpu_custom_call.1
$region0: #{tpu_custom_call.1}
  #allocation0 [shape = 'u32[]', space=smem, size = 0x4, offset = 0x4, fixed_abs, tag = 'smem constant byte address 0x4 - core index']
  #allocation1 [shape = 'u32[144,128]{1,0:T(1,128)}', space=vmem, size = 0x12000, scoped, tag = 'internal scratch']
  %s0 = inlined_call_operand.hbm [shape: bf16[16,32], index: 0, kind: input, shape index: {}]
  %s1 = inlined_call_operand.hbm [shape: bf16[32,32], index: 1, kind: input, shape index: {}]
  %s2 = inlined_call_operand.vmem [shape: f32[1,32], index: 2, kind: input, shape index: {}]
  %s3 = inlined_call_operand.hbm [shape: bf16[32,256], index: 3, kind: input, shape index: {}]
  %s4 = inlined_call_operand.vmem [shape: f32[1,256], index: 4, kind: input, shape index: {}]
  %s5 = inlined_call_operand.hbm [shape: bf16[16,256], index: 5, kind: output, shape index: {}]
  %s6 = sld [smem:[#allocation0]]
  $region65: #{tpu_custom_call.1} parent=0
    _
  %s8 = ssub.s32 1, %s6
  %s9 = scalar_select 0, %s8, %s6
  $region1: #{tpu_custom_call.1} parent=0
    #allocation2 [shape = 'u8[4096]{0}', space=vmem, size = 0x1000, scoped, tag = 'input window, operand 0']
    #allocation3 [shape = 's32[2]{0}', space=sflag, size = 0x8, scoped, tag = 'scoped memory for tpu_custom_call.1']
    #allocation4 [shape = 's32[2]{0}', space=sflag, size = 0x8, scoped, tag = 'scoped memory for tpu_custom_call.1']
    #allocation5 [shape = 'u8[8192]{0}', space=vmem, size = 0x2000, scoped, tag = 'input window, operand 1, single buffered']
    #allocation6 [shape = 's32[1]{0}', space=sflag, size = 0x4, scoped, tag = 'scoped memory for tpu_custom_call.1']
    #allocation7 [shape = 'u8[16384]{0}', space=vmem, size = 0x4000, scoped, tag = 'input window, operand 3, single buffered']
    #allocation8 [shape = 'u8[8192]{0}', space=vmem, size = 0x2000, scoped, tag = 'output window, operand 0']
    %10 = vsyncpa [#allocation3], 0
    %s11 = scalar_lea.sflag [#allocation3], 1
    %12 = vsyncpa %s11, 0
    %13 = vsyncpa [#allocation6], 0
    %14 = vsyncpa [#allocation4], 0
    %s15 = scalar_lea.sflag [#allocation4], 1
    %16 = vsyncpa %s15, 0
    loop: start=0, step=1, limit=4
    $region2: #{tpu_custom_call.1} parent=1 // loop_pre_header
      _
    $region3: #{tpu_custom_call.1} parent=1 // loop_header
      %s18 = sphi 0, %s22
      %p19 = scmp.ge.s32.totalorder %s18, 4
      %s28 = sphi 0, %s30
      %s31 = sphi 0, %s28
      %s32 = sphi 0, %s31
      %s48 = sphi 0, %s32
      %s52 = sphi 0, %s52
      %s54 = sphi 0, %s52
      %s55 = sphi 0, %s54
      %s69 = sphi 0, %s55
      %s73 = sphi 0, %s73
      %s75 = sphi 0, %s73
      %s76 = sphi 0, %s75
      %s90 = sphi 0, %s76
      %s94 = sphi 0, %s94
      %s96 = sphi 0, %s94
      %s97 = sphi 0, %s96
      %s111 = sphi 0, %s97
      %s115 = sphi 0, %s115
      %s117 = sphi 0, %s115
      %s118 = sphi 0, %s117
      %s132 = sphi 0, %s118
      %s138 = sphi 0, %s140
      %s141 = sphi 0, %s138
      %s142 = sphi 0, %s141
      %s158 = sphi 0, %s142
    $region4: #{tpu_custom_call.1} parent=1 // loop_header_branch
      %21 = sbr.rel (%p19) target = $region8
    $region5: #{tpu_custom_call.1} parent=1 // loop_body
      %s23 = ssub.s32 %s18, 1
      %s24 = ssub.s32 %s18, 2
      %s25 = sadd.s32 %s18, 1
      %s26 = ssub.s32 %s18, %s25
      %p27 = scmp.eq.s32.totalorder %s26, 0
      %s29 = sadd.s32 %s28, 1
      %s30 = scalar_select %p27, %s28, %s29
      %p33 = pneg %p27
      %p34 = scmp.eq.s32.totalorder %s18, 1
      %p35 = por %p33, %p34
      %p36 = scmp.ne.s32.totalorder %s28, %s31
      %p37 = scmp.eq.s32.totalorder %s18, 0
      %p38 = por %p36, %p37
      %p39 = scmp.ne.s32.totalorder %s28, %s31
      %p40 = scmp.eq.s32.totalorder %s23, 1
      %p41 = por %p39, %p40
      %p42 = scmp.ne.s32.totalorder %s31, %s32
      %p43 = scmp.eq.s32.totalorder %s23, 0
      %p44 = por %p42, %p43
      %p45 = scmp.ne.s32.totalorder %s31, %s32
      %p46 = scmp.eq.s32.totalorder %s24, 1
      %p47 = por %p45, %p46
      %p49 = scmp.ne.s32.totalorder %s32, %s48
      %p50 = scmp.eq.s32.totalorder %s24, 0
      %p51 = por %p49, %p50
      %s53 = sadd.s32 %s52, 1
      %p56 = scmp.eq.s32.totalorder %s18, 1
      %p57 = scmp.ne.s32.totalorder %s52, %s54
      %p58 = scmp.eq.s32.totalorder %s18, 0
      %p59 = por %p57, %p58
      %p60 = scmp.ne.s32.totalorder %s52, %s54
      %p61 = scmp.eq.s32.totalorder %s23, 1
      %p62 = por %p60, %p61
      %p63 = scmp.ne.s32.totalorder %s54, %s55
      %p64 = scmp.eq.s32.totalorder %s23, 0
      %p65 = por %p63, %p64
      %p66 = scmp.ne.s32.totalorder %s54, %s55
      %p67 = scmp.eq.s32.totalorder %s24, 1
      %p68 = por %p66, %p67
      %p70 = scmp.ne.s32.totalorder %s55, %s69
      %p71 = scmp.eq.s32.totalorder %s24, 0
      %p72 = por %p70, %p71
      %s74 = sadd.s32 %s73, 1
      %p77 = scmp.eq.s32.totalorder %s18, 1
      %p78 = scmp.ne.s32.totalorder %s73, %s75
      %p79 = scmp.eq.s32.totalorder %s18, 0
      %p80 = por %p78, %p79
      %p81 = scmp.ne.s32.totalorder %s73, %s75
      %p82 = scmp.eq.s32.totalorder %s23, 1
      %p83 = por %p81, %p82
      %p84 = scmp.ne.s32.totalorder %s75, %s76
      %p85 = scmp.eq.s32.totalorder %s23, 0
      %p86 = por %p84, %p85
      %p87 = scmp.ne.s32.totalorder %s75, %s76
      %p88 = scmp.eq.s32.totalorder %s24, 1
      %p89 = por %p87, %p88
      %p91 = scmp.ne.s32.totalorder %s76, %s90
      %p92 = scmp.eq.s32.totalorder %s24, 0
      %p93 = por %p91, %p92
      %s95 = sadd.s32 %s94, 1
      %p98 = scmp.eq.s32.totalorder %s18, 1
      %p99 = scmp.ne.s32.totalorder %s94, %s96
      %p100 = scmp.eq.s32.totalorder %s18, 0
      %p101 = por %p99, %p100
      %p102 = scmp.ne.s32.totalorder %s94, %s96
      %p103 = scmp.eq.s32.totalorder %s23, 1
      %p104 = por %p102, %p103
      %p105 = scmp.ne.s32.totalorder %s96, %s97
      %p106 = scmp.eq.s32.totalorder %s23, 0
      %p107 = por %p105, %p106
      %p108 = scmp.ne.s32.totalorder %s96, %s97
      %p109 = scmp.eq.s32.totalorder %s24, 1
      %p110 = por %p108, %p109
      %p112 = scmp.ne.s32.totalorder %s97, %s111
      %p113 = scmp.eq.s32.totalorder %s24, 0
      %p114 = por %p112, %p113
      %s116 = sadd.s32 %s115, 1
      %p119 = scmp.eq.s32.totalorder %s18, 1
      %p120 = scmp.ne.s32.totalorder %s115, %s117
      %p121 = scmp.eq.s32.totalorder %s18, 0
      %p122 = por %p120, %p121
      %p123 = scmp.ne.s32.totalorder %s115, %s117
      %p124 = scmp.eq.s32.totalorder %s23, 1
      %p125 = por %p123, %p124
      %p126 = scmp.ne.s32.totalorder %s117, %s118
      %p127 = scmp.eq.s32.totalorder %s23, 0
      %p128 = por %p126, %p127
      %p129 = scmp.ne.s32.totalorder %s117, %s118
      %p130 = scmp.eq.s32.totalorder %s24, 1
      %p131 = por %p129, %p130
      %p133 = scmp.ne.s32.totalorder %s118, %s132
      %p134 = scmp.eq.s32.totalorder %s24, 0
      %p135 = por %p133, %p134
      %s136 = ssub.s32 %s18, %s25
      %p137 = scmp.eq.s32.totalorder %s136, 0
      %s139 = sadd.s32 %s138, 1
      %s140 = scalar_select %p137, %s138, %s139
      %p143 = pneg %p137
      %p144 = scmp.eq.s32.totalorder %s18, 1
      %p145 = por %p143, %p144
      %p146 = scmp.ne.s32.totalorder %s138, %s141
      %p147 = scmp.eq.s32.totalorder %s18, 0
      %p148 = por %p146, %p147
      %p149 = scmp.ne.s32.totalorder %s138, %s141
      %p150 = scmp.eq.s32.totalorder %s23, 1
      %p151 = por %p149, %p150
      %p152 = scmp.ne.s32.totalorder %s141, %s142
      %p153 = scmp.eq.s32.totalorder %s23, 0
      %p154 = por %p152, %p153
      %p155 = scmp.ne.s32.totalorder %s141, %s142
      %p156 = scmp.eq.s32.totalorder %s24, 1
      %p157 = por %p155, %p156
      %p159 = scmp.ne.s32.totalorder %s142, %s158
      %p160 = scmp.eq.s32.totalorder %s24, 0
      %p161 = por %p159, %p160
      %p162 = scmp.le.s32.totalorder 1, %s18
      %p163 = scmp.lt.s32.totalorder %s18, 3
      %p164 = pnand %p162, %p163
      %p165 = pneg %p164
      // Predicated region
      $region9: #{tpu_custom_call.1} parent=5 // pred_check
        _
      $region10: #{tpu_custom_call.1} parent=5 // pred_check_branch
        %167 = sbr.rel (%p164) target = $region12
      $region11: #{tpu_custom_call.1} parent=5 // pred_region
        %s168 = ssub.s32 %s18, 1
        // Predicated region
        $region13: #{tpu_custom_call.1} parent=11 // pred_check
          %p169 = pneg %p65
        $region14: #{tpu_custom_call.1} parent=11 // pred_check_branch
          %171 = sbr.rel (%p169) target = $region16
        $region15: #{tpu_custom_call.1} parent=11 // pred_region
          %s173 = ssub.s32 256, 256
          %174 = vsyncadd [#allocation6], %s173
          %s175 = sshll.u32 [#allocation5], 4
          %s176 = int_to_ptr.vmem [resolvable:$true] %s175
          %181 = dma.hbm_to_vmem [thread:$0]  %s1, 256, %s176, [#allocation6], 64, 64, 4
        $region16: #{tpu_custom_call.1} parent=11 // pred_fallthru
          _
        // Predicated region
        $region17: #{tpu_custom_call.1} parent=11 // pred_check
          %p182 = pneg %p86
        $region18: #{tpu_custom_call.1} parent=11 // pred_check_branch
          %184 = sbr.rel (%p182) target = $region20
        $region19: #{tpu_custom_call.1} parent=11 // pred_region
          _
        $region20: #{tpu_custom_call.1} parent=11 // pred_fallthru
          _
        // Predicated region
        $region21: #{tpu_custom_call.1} parent=11 // pred_check
          %p185 = pneg %p107
        $region22: #{tpu_custom_call.1} parent=11 // pred_check_branch
          %187 = sbr.rel (%p185) target = $region24
        $region23: #{tpu_custom_call.1} parent=11 // pred_region
          %s189 = ssub.s32 512, 512
          %190 = vsyncadd [#allocation6], %s189
          %s191 = sshll.u32 [#allocation7], 4
          %s192 = int_to_ptr.vmem [resolvable:$true] %s191
          %197 = dma.hbm_to_vmem [thread:$0]  %s3, 512, %s192, [#allocation6], 128, 128, 8
        $region24: #{tpu_custom_call.1} parent=11 // pred_fallthru
          _
        // Predicated region
        $region25: #{tpu_custom_call.1} parent=11 // pred_check
          %p198 = pneg %p128
        $region26: #{tpu_custom_call.1} parent=11 // pred_check_branch
          %200 = sbr.rel (%p198) target = $region28
        $region27: #{tpu_custom_call.1} parent=11 // pred_region
          _
        $region28: #{tpu_custom_call.1} parent=11 // pred_fallthru
          _
      $region12: #{tpu_custom_call.1} parent=5 // pred_fallthru
        _
      %p201 = scmp.lt.s32.totalorder %s18, 2
      // Predicated region
      $region29: #{tpu_custom_call.1} parent=5 // pred_check
        %p202 = pneg %p201
      $region30: #{tpu_custom_call.1} parent=5 // pred_check_branch
        %204 = sbr.rel (%p202) target = $region32
      $region31: #{tpu_custom_call.1} parent=5 // pred_region
        // Predicated region
        $region33: #{tpu_custom_call.1} parent=31 // pred_check
          %p205 = pneg %p38
        $region34: #{tpu_custom_call.1} parent=31 // pred_check_branch
          %207 = sbr.rel (%p205) target = $region36
        $region35: #{tpu_custom_call.1} parent=31 // pred_region
          %s208 = sand.u32 %s28, 1
          %s209 = scalar_lea.sflag [#allocation3], %s208
          %s210 = sand.u32 %s28, 1
          %s211 = smul.addr %s210, 4
          %s212 = scalar_lea.vmem [#allocation2], %s211
          %s214 = ssub.s32 64, 64
          %215 = vsyncadd %s209, %s214
          %s216 = smul.addr %s18, 64
          %s217 = scalar_lea.hbm %s0, %s216
          %s219 = sshll.u32 %s212, 4
          %s220 = int_to_ptr.vmem [resolvable:$true] %s219
          %222 = dma.hbm_to_vmem [thread:$0]  %s217, 64, %s220, %s209
        $region36: #{tpu_custom_call.1} parent=31 // pred_fallthru
          _
      $region32: #{tpu_custom_call.1} parent=5 // pred_fallthru
        _
      %p223 = scmp.le.s32.totalorder 1, %s18
      %p224 = scmp.lt.s32.totalorder %s18, 3
      %p225 = pnand %p223, %p224
      %p226 = pneg %p225
      // Predicated region
      $region37: #{tpu_custom_call.1} parent=5 // pred_check
        _
      $region38: #{tpu_custom_call.1} parent=5 // pred_check_branch
        %228 = sbr.rel (%p225) target = $region40
      $region39: #{tpu_custom_call.1} parent=5 // pred_region
        %s229 = ssub.s32 %s18, 1
        %s230 = sand.u32 %s31, 1
        %s231 = scalar_lea.sflag [#allocation3], %s230
        %s232 = sand.u32 %s31, 1
        %s233 = smul.addr %s232, 4
        %s234 = scalar_lea.vmem [#allocation2], %s233
        // Predicated region
        $region41: #{tpu_custom_call.1} parent=39 // pred_check
          %p235 = pneg %p44
        $region42: #{tpu_custom_call.1} parent=39 // pred_check_branch
          %237 = sbr.rel (%p235) target = $region44
        $region43: #{tpu_custom_call.1} parent=39 // pred_region
          %238 = dma.done %s231, 64
        $region44: #{tpu_custom_call.1} parent=39 // pred_fallthru
          _
        // Predicated region
        $region45: #{tpu_custom_call.1} parent=39 // pred_check
          %p239 = pneg %p65
        $region46: #{tpu_custom_call.1} parent=39 // pred_check_branch
          %241 = sbr.rel (%p239) target = $region48
        $region47: #{tpu_custom_call.1} parent=39 // pred_region
          %242 = dma.done [#allocation6], 256
        $region48: #{tpu_custom_call.1} parent=39 // pred_fallthru
          _
        // Predicated region
        $region49: #{tpu_custom_call.1} parent=39 // pred_check
          %p243 = pneg %p107
        $region50: #{tpu_custom_call.1} parent=39 // pred_check_branch
          %245 = sbr.rel (%p243) target = $region52
        $region51: #{tpu_custom_call.1} parent=39 // pred_region
          %246 = dma.done [#allocation6], 512
        $region52: #{tpu_custom_call.1} parent=39 // pred_fallthru
          _
        %s247 = sand.u32 %s31, 1
        %s248 = scalar_lea.sflag [#allocation3], %s247
        %s249 = sand.u32 %s31, 1
        %s250 = smul.addr %s249, 4
        %s251 = scalar_lea.vmem [#allocation2], %s250
        %p252 = pneg %p44
        %p253 = pneg %p41
        %p254 = pneg %p65
        %p255 = pneg %p62
        %p256 = pneg %p86
        %p257 = pneg %p83
        %p258 = pneg %p107
        %p259 = pneg %p104
        %p260 = pneg %p128
        %p261 = pneg %p125
        %p262 = pneg %p154
        %p263 = pneg %p151
        %s264 = sand.u32 %s141, 1
        %s265 = scalar_lea.sflag [#allocation4], %s264
        %s266 = sand.u32 %s141, 1
        %s267 = smul.addr %s266, 8
        %s268 = scalar_lea.vmem [#allocation8], %s267
        %v270 = vld [vmem:[%s234] sm:$0xf]
        %v271 = vld [vmem:[#allocation5] sm:$0xf]
        %v272 = vld [vmem:[#allocation5 + $0x4] sm:$0xf]
        %v273 = vld [vmem:[#allocation5 + $0x8] sm:$0xf]
        %v274 = vld [vmem:[#allocation5 + $0xc] sm:$0xf]
        %v275 = vld [vmem:[%s2] sm:$0x1]
        %v277 = vlaneseq
        %v278 = vshrl.u32 %v277, 7
        %v279 = vsub.s32 0, %v278
        %v280 = vrot.slane %v275, %v279
        %v286 = vunpack.c.l.b16 %v271
        %v287 = vunpack.c.l.b16 %v272
        %v288 = vunpack.c.l.b16 %v273
        %v289 = vunpack.c.l.b16 %v274
        %v290 = vpack.c.b16 %v287, %v286
        %v291 = vpack.c.b16 %v289, %v288
        %vm294 = vcmask 261120
        %v296 = vsel %vm294, %v270, 0
        %298 = vmatprep.subr.bf16.mxu0 0
        %299 = vmatpush1.bf16.msra.mxu0 %v290
        %300 = vmatprep.subr.bf16.mxu0 0
        %301 = vmatpush1.bf16.msra.mxu0 %v291
        %302 = vmatprep.subr.bf16.mxu0 0
        %303 = vmatpush1.bf16.msra.mxu0 0
        %304 = vmatprep.subr.bf16.mxu0 0
        %305 = vmatpush1.bf16.msra.mxu0 0
        %306 = vmatprep.subr.bf16.mxu0 0
        %307 = vmatpush1.bf16.msra.mxu0 0
        %308 = vmatprep.subr.bf16.mxu0 0
        %309 = vmatpush1.bf16.msra.mxu0 0
        %310 = vmatprep.subr.bf16.mxu0 0
        %311 = vmatpush1.bf16.msra.mxu0 0
        %312 = vmatprep.subr.bf16.mxu0 0
        %313 = vmatpush1.bf16.msra.mxu0 0
        %314 = vmatprep.subr.bf16.mxu0 0
        %315 = vmatpush1.bf16.msra.mxu0 0
        %316 = vmatprep.subr.bf16.mxu0 0
        %317 = vmatpush1.bf16.msra.mxu0 0
        %318 = vmatprep.subr.bf16.mxu0 0
        %319 = vmatpush1.bf16.msra.mxu0 0
        %320 = vmatprep.subr.bf16.mxu0 0
        %321 = vmatpush1.bf16.msra.mxu0 0
        %322 = vmatprep.subr.bf16.mxu0 0
        %323 = vmatpush1.bf16.msra.mxu0 0
        %324 = vmatprep.subr.bf16.mxu0 0
        %325 = vmatpush1.bf16.msra.mxu0 0
        %326 = vmatprep.subr.bf16.mxu0 0
        %327 = vmatpush1.bf16.msra.mxu0 0
        %328 = vmatprep.subr.bf16.mxu0 0
        %329 = vmatpush1.bf16.msra.mxu0 0
        %330 = vmatprep.mubr.bf16.mxu0 0
        %331 = vmatmul.mubr.bf16.gmra.mrb[0].mxu0 %v296
        %v332 = vpop.f32.mrb[0].mxu0
        %v333 = vadd.f32 %v280, %v332
        %v334 = vpop.f32.mrb[0].mxu0
        %v335 = vpop.f32.mrb[0].mxu0
        %v336 = vpop.f32.mrb[0].mxu0
        %337 = vdwg.mxu0
        %v338 = vmax.f32 %v333, 0.0
        %v339 = vld [vmem:[#allocation7] sm:$0xff]
        %v340 = vld [vmem:[#allocation7 + $0x8] sm:$0xff]
        %v341 = vld [vmem:[#allocation7 + $0x10] sm:$0xff]
        %v342 = vld [vmem:[#allocation7 + $0x18] sm:$0xff]
        %v343 = vunpack.c.l.bf16 %v339
        %v344 = vunpack.c.h.bf16 %v339
        %v345 = vunpack.c.l.bf16 %v340
        %v346 = vunpack.c.h.bf16 %v340
        %v347 = vunpack.c.l.bf16 %v341
        %v348 = vunpack.c.h.bf16 %v341
        %v349 = vunpack.c.l.bf16 %v342
        %v350 = vunpack.c.h.bf16 %v342
        %v351 = vld [vmem:[%s4] sm:$0x3]
        %v353 = vlaneseq
        %v354 = vshrl.u32 %v353, 7
        %v355 = vsub.s32 0, %v354
        %v356 = vrot.slane %v351, %v355
        %v357 = vlaneseq
        %v358 = vshrl.u32 %v357, 7
        %v359 = vsub.s32 1, %v358
        %v360 = vrot.slane %v351, %v359
        %v364 = vsel %vm294, %v338, 0
        %366 = vmatprep.subr.mxu0 %v344
        %367 = vmatpush1.msra.mxu0 %v343
        %368 = vmatprep.subr.mxu0 %v346
        %369 = vmatpush1.msra.mxu0 %v345
        %370 = vmatprep.subr.mxu0 %v348
        %371 = vmatpush1.msra.mxu0 %v347
        %372 = vmatprep.subr.mxu0 %v350
        %373 = vmatpush1.msra.mxu0 %v349
        %374 = vmatprep.subr.mxu0 0.0
        %375 = vmatpush1.msra.mxu0 0.0
        %376 = vmatprep.subr.mxu0 0.0
        %377 = vmatpush1.msra.mxu0 0.0
        %378 = vmatprep.subr.mxu0 0.0
        %379 = vmatpush1.msra.mxu0 0.0
        %380 = vmatprep.subr.mxu0 0.0
        %381 = vmatpush1.msra.mxu0 0.0
        %382 = vmatprep.subr.mxu0 0.0
        %383 = vmatpush1.msra.mxu0 0.0
        %384 = vmatprep.subr.mxu0 0.0
        %385 = vmatpush1.msra.mxu0 0.0
        %386 = vmatprep.subr.mxu0 0.0
        %387 = vmatpush1.msra.mxu0 0.0
        %388 = vmatprep.subr.mxu0 0.0
        %389 = vmatpush1.msra.mxu0 0.0
        %390 = vmatprep.subr.mxu0 0.0
        %391 = vmatpush1.msra.mxu0 0.0
        %392 = vmatprep.subr.mxu0 0.0
        %393 = vmatpush1.msra.mxu0 0.0
        %394 = vmatprep.subr.mxu0 0.0
        %395 = vmatpush1.msra.mxu0 0.0
        %396 = vmatprep.subr.mxu0 0.0
        %397 = vmatpush1.msra.mxu0 0.0
        %398 = vmatprep.subr.mxu0 0.0
        %399 = vmatpush1.msra.mxu0 0.0
        %400 = vmatprep.subr.mxu0 0.0
        %401 = vmatpush1.msra.mxu0 0.0
        %402 = vmatprep.subr.mxu0 0.0
        %403 = vmatpush1.msra.mxu0 0.0
        %404 = vmatprep.subr.mxu0 0.0
        %405 = vmatpush1.msra.mxu0 0.0
        %406 = vmatprep.subr.mxu0 0.0
        %407 = vmatpush1.msra.mxu0 0.0
        %408 = vmatprep.subr.mxu0 0.0
        %409 = vmatpush1.msra.mxu0 0.0
        %410 = vmatprep.subr.mxu0 0.0
        %411 = vmatpush1.msra.mxu0 0.0
        %412 = vmatprep.subr.mxu0 0.0
        %413 = vmatpush1.msra.mxu0 0.0
        %414 = vmatprep.subr.mxu0 0.0
        %415 = vmatpush1.msra.mxu0 0.0
        %416 = vmatprep.subr.mxu0 0.0
        %417 = vmatpush1.msra.mxu0 0.0
        %418 = vmatprep.subr.mxu0 0.0
        %419 = vmatpush1.msra.mxu0 0.0
        %420 = vmatprep.subr.mxu0 0.0
        %421 = vmatpush1.msra.mxu0 0.0
        %422 = vmatprep.subr.mxu0 0.0
        %423 = vmatpush1.msra.mxu0 0.0
        %424 = vmatprep.subr.mxu0 0.0
        %425 = vmatpush1.msra.mxu0 0.0
        %426 = vmatprep.subr.mxu0 0.0
        %427 = vmatpush1.msra.mxu0 0.0
        %428 = vmatprep.subr.mxu0 0.0
        %429 = vmatpush1.msra.mxu0 0.0
        %430 = vmatprep.mubr.f32.mxu0 0.0
        %431 = vmatmul.mubr.f32.gmra.mrb[0].mxu0 %v364
        %v432 = vpop.f32.mrb[0].mxu0
        %v433 = vadd.f32 %v356, %v432
        %v434 = vpop.f32.mrb[0].mxu0
        %v435 = vadd.f32 %v360, %v434
        %436 = vdwg.mxu0
        %v437 = vpack.c.bf16 %v433, %v433
        %v438 = vpack.c.bf16 %v435, %v435
        %v441 = vunpack.c.l.b16 %v437
        %v442 = vunpack.c.l.b16 %v438
        %v443 = vpack.c.b16 %v442, %v441
        %445 = vst [vmem:[%s268] sm:$0xff] %v443
        %s446 = sand.u32 %s141, 1
        %s447 = scalar_lea.sflag [#allocation4], %s446
        %s448 = sand.u32 %s141, 1
        %s449 = smul.addr %s448, 8
        %s450 = scalar_lea.vmem [#allocation8], %s449
        // Predicated region
        $region53: #{tpu_custom_call.1} parent=39 // pred_check
          %p451 = pneg %p151
        $region54: #{tpu_custom_call.1} parent=39 // pred_check_branch
          %453 = sbr.rel (%p451) target = $region56
        $region55: #{tpu_custom_call.1} parent=39 // pred_region
          %s455 = ssub.s32 128, 128
          %456 = vsyncadd %s447, %s455
          %s457 = smul.addr %s23, 2
          %s458 = smul.addr %s457, 64
          %s459 = scalar_lea.hbm %s5, %s458
          %s461 = sshll.u32 %s450, 4
          %s462 = int_to_ptr.vmem [resolvable:$true] %s461
          %464 = dma.vmem_to_hbm [thread:$0]  %s462, 128, %s459, %s447
        $region56: #{tpu_custom_call.1} parent=39 // pred_fallthru
          _
      $region40: #{tpu_custom_call.1} parent=5 // pred_fallthru
        _
      %p465 = scmp.le.s32.totalorder 2, %s18
      // Predicated region
      $region57: #{tpu_custom_call.1} parent=5 // pred_check
        %p466 = pneg %p465
      $region58: #{tpu_custom_call.1} parent=5 // pred_check_branch
        %468 = sbr.rel (%p466) target = $region60
      $region59: #{tpu_custom_call.1} parent=5 // pred_region
        %s469 = ssub.s32 %s18, 2
        // Predicated region
        $region61: #{tpu_custom_call.1} parent=59 // pred_check
          %p470 = pneg %p157
        $region62: #{tpu_custom_call.1} parent=59 // pred_check_branch
          %472 = sbr.rel (%p470) target = $region64
        $region63: #{tpu_custom_call.1} parent=59 // pred_region
          %s473 = sand.u32 %s142, 1
          %s474 = scalar_lea.sflag [#allocation4], %s473
          %s475 = sand.u32 %s142, 1
          %s476 = smul.addr %s475, 8
          %s477 = scalar_lea.vmem [#allocation8], %s476
          %478 = dma.done %s474, 128
        $region64: #{tpu_custom_call.1} parent=59 // pred_fallthru
          _
      $region60: #{tpu_custom_call.1} parent=5 // pred_fallthru
        _
    $region6: #{tpu_custom_call.1} parent=1 // loop_footer
      %s22 = sadd.s32 1, %s18
    $region7: #{tpu_custom_call.1} parent=1 // loop_footer_branch
      %17 = sbr.rel target = $region3
    $region8: #{tpu_custom_call.1} parent=1 // loop_exit
      _
    %479 = vsyncpa [#allocation3], 1
    %s480 = scalar_lea.sflag [#allocation3], 1
    %481 = vsyncpa %s480, 1
    %482 = vsyncpa [#allocation6], 1
    %483 = vsyncpa [#allocation4], 1
    %s484 = scalar_lea.sflag [#allocation4], 1
    %485 = vsyncpa %s484, 1

</llo_original>
